<compile_context>
chip_gen: v5e
topology: v5e:2x2
jax: 0.10.0
libtpu: 0.0.40
codegen_flags: <defaults>
</compile_context>

<pallas_src>
import jax
import jax.numpy as jnp
from jax.experimental import pallas as pl
from jax.experimental.pallas import tpu as pltpu


def _round_up(x, m):
    return ((x + m - 1) // m) * m


def _stats_kernel(x_ref, w_ref, s_ref):
    """Accumulate per-channel sum and sum-of-squares of y = relu(x) @ W_bd."""
    @pl.when(pl.program_id(0) == 0)
    def _():
        s_ref[...] = jnp.zeros_like(s_ref)

    xr = jnp.maximum(x_ref[...], 0.0)
    y = jnp.dot(xr, w_ref[...], preferred_element_type=jnp.float32)   # (TM, C_out)
    s_ref[...] += jnp.concatenate(
        [jnp.sum(y, axis=0, keepdims=True),
         jnp.sum(y * y, axis=0, keepdims=True)], axis=0)


def _normalize_kernel(x_ref, w_ref, scale_ref, shift_ref, o_ref):
    """y = relu(x) @ W_bd ; out = y * scale + shift (folded BatchNorm affine)."""
    xr = jnp.maximum(x_ref[...], 0.0)
    y = jnp.dot(xr, w_ref[...], preferred_element_type=jnp.float32)   # (TM, C_out)
    o_ref[...] = (y * scale_ref[...] + shift_ref[...]).astype(o_ref.dtype)


def factorized_reduce(x_nchw, w1, w2, gamma, beta, *, eps=1e-5, tile_m=512):
    """Forward of FactorizedReduce.

    x_nchw: (N, C_in, H, W) float32 (NCHW, as in PyTorch)
    w1, w2: (C_out//2, C_in, 1, 1) conv weights (PyTorch Conv2d layout)
    gamma, beta: (C_out,) BatchNorm affine parameters
    returns: (N, C_out, H//2, W//2)
    """
    N, C_in, H, W = x_nchw.shape
    C_half = w1.shape[0]
    C_out = 2 * C_half
    Ho, Wo = (H - 1) // 2 + 1, (W - 1) // 2 + 1          # conv_1 output spatial
    assert ((H - 2) // 2 + 1, (W - 2) // 2 + 1) == (Ho, Wo), \
        "use even H, W so both conv branches produce the same spatial size"
    M = N * Ho * Wo

    # ---- wrapper glue (plain JAX): layout + stride-2 subsample + weight prep ----
    # relu(x)[::2] == relu(x[::2]), so the subsample commutes with the in-kernel ReLU.
    x = jnp.transpose(x_nchw, (0, 2, 3, 1)).astype(jnp.float32)       # NHWC
    x_cat = jnp.concatenate(
        [x[:, ::2, ::2, :],            # conv_1 path
         x[:, 1::2, 1::2, :]],         # x[:, :, 1:, 1:] conv_2 path
        axis=-1).reshape(M, 2 * C_in)

    # Block-diagonal weight: first C_in rows -> conv_1 channels, last -> conv_2.
    w1m = w1[:, :, 0, 0].T.astype(jnp.float32)                        # (C_in, C_half)
    w2m = w2[:, :, 0, 0].T.astype(jnp.float32)
    w_bd = jnp.zeros((2 * C_in, C_out), jnp.float32)
    w_bd = w_bd.at[:C_in, :C_half].set(w1m)
    w_bd = w_bd.at[C_in:, C_half:].set(w2m)

    # Tile over M (sublane aligned). Zero-padded rows contribute nothing to the stats.
    TM = min(tile_m, _round_up(M, 8))
    M_pad = _round_up(M, TM)
    if M_pad != M:
        x_cat = jnp.pad(x_cat, ((0, M_pad - M), (0, 0)))
    n_tiles = M_pad // TM

    x_spec = pl.BlockSpec((TM, 2 * C_in), lambda i: (i, 0))
    w_spec = pl.BlockSpec((2 * C_in, C_out), lambda i: (0, 0))
    vmem_limit = 48 * 1024 * 1024   # explicit; safe on v5e/v6e/v7x scoped limits

    # ---- pass 1: global per-channel sum / sum-of-squares ------------------------
    stats = pl.pallas_call(
        _stats_kernel,
        out_shape=jax.ShapeDtypeStruct((2, C_out), jnp.float32),
        grid=(n_tiles,),
        in_specs=[x_spec, w_spec],
        out_specs=pl.BlockSpec((2, C_out), lambda i: (0, 0)),
        compiler_params=pltpu.CompilerParams(
            dimension_semantics=("arbitrary",),
            vmem_limit_bytes=vmem_limit),
    )(x_cat, w_bd)

    # Fold BN (training-mode batch stats, biased variance) into scale/shift.
    g = gamma.astype(jnp.float32)
    b = beta.astype(jnp.float32)
    mean = stats[0] / M
    var = stats[1] / M - mean * mean
    inv = jax.lax.rsqrt(var + eps)
    scale = (g * inv).reshape(1, C_out)
    shift = (b - mean * g * inv).reshape(1, C_out)

    # ---- pass 2: recompute tile matmul, apply folded affine (lane-dense out) ----
    out_flat = pl.pallas_call(
        _normalize_kernel,
        out_shape=jax.ShapeDtypeStruct((M_pad, C_out), jnp.float32),
        grid=(n_tiles,),
        in_specs=[x_spec, w_spec,
                  pl.BlockSpec((1, C_out), lambda i: (0, 0)),
                  pl.BlockSpec((1, C_out), lambda i: (0, 0))],
        out_specs=pl.BlockSpec((TM, C_out), lambda i: (i, 0)),
        compiler_params=pltpu.CompilerParams(
            dimension_semantics=("parallel",),
            vmem_limit_bytes=vmem_limit),
    )(x_cat, w_bd, scale, shift)

    # ---- wrapper glue back to NCHW (conv_1 channels first, then conv_2) ---------
    out = out_flat[:M].reshape(N, Ho, Wo, C_out)
    return jnp.transpose(out, (0, 3, 1, 2))


def factorized_reduce_ref(x_nchw, w1, w2, gamma, beta, eps=1e-5):
    """Pure-JAX reference matching the PyTorch module (training-mode BN)."""
    x = jnp.maximum(x_nchw, 0.0)
    xe = x[:, :, ::2, ::2]
    xo = x[:, :, 1::2, 1::2]
    y1 = jnp.einsum("nchw,oc->nohw", xe, w1[:, :, 0, 0])
    y2 = jnp.einsum("nchw,oc->nohw", xo, w2[:, :, 0, 0])
    y = jnp.concatenate([y1, y2], axis=1)
    mean = jnp.mean(y, axis=(0, 2, 3), keepdims=True)
    var = jnp.mean((y - mean) ** 2, axis=(0, 2, 3), keepdims=True)
    yn = (y - mean) / jnp.sqrt(var + eps)
    return yn * gamma[None, :, None, None] + beta[None, :, None, None]


if __name__ == "__main__":
    N, C_in, H, W = 2, 4, 16, 16
    C_out = 8

    key = jax.random.PRNGKey(0)
    kx, k1, k2 = jax.random.split(key, 3)
    x = jax.random.normal(kx, (N, C_in, H, W), dtype=jnp.float32)
    # Same shapes as nn.Conv2d(C_in, C_out//2, 1, stride=2, bias=False).
    w1 = jax.random.normal(k1, (C_out // 2, C_in, 1, 1), dtype=jnp.float32) * 0.5
    w2 = jax.random.normal(k2, (C_out // 2, C_in, 1, 1), dtype=jnp.float32) * 0.5
    # BatchNorm2d(affine=True) default init: weight=1, bias=0.
    gamma = jnp.ones((C_out,), jnp.float32)
    beta = jnp.zeros((C_out,), jnp.float32)

    out = jax.block_until_ready(factorized_reduce(x, w1, w2, gamma, beta))
    ref = factorized_reduce_ref(x, w1, w2, gamma, beta)

    assert out.shape == (N, C_out, H // 2, W // 2), out.shape
    assert jnp.allclose(out, ref, atol=1e-4, rtol=1e-4), \
        float(jnp.max(jnp.abs(out - ref)))
    print("KERNEL_OK")
</pallas_src>

<mosaic_0001>
module attributes {stable_mosaic.version = 11 : i64} {
  func.func @_stats_kernel(%arg0: i32, %arg1: memref<128x8xf32, #tpu.memory_space<vmem>>, %arg2: memref<8x8xf32, #tpu.memory_space<vmem>>, %arg3: memref<2x8xf32, #tpu.memory_space<vmem>>) attributes {dimension_semantics = [#tpu.dimension_semantics<arbitrary>], iteration_bounds = array<i64: 1>, scalar_prefetch = 0 : i64, scratch_operands = 0 : i64, tpu.core_type = #tpu.core_type<tc>, window_params = [{transform_indices = @transform_0, window_bounds = array<i64: 128, 8>}, {pipeline_mode = #tpu.pipeline_mode<synchronous>, transform_indices = @transform_1, window_bounds = array<i64: 8, 8>}, {pipeline_mode = #tpu.pipeline_mode<synchronous>, transform_indices = @transform_2, window_bounds = array<i64: 2, 8>}]} {
    %c0_i32 = arith.constant 0 : i32
    %0 = arith.cmpi eq, %arg0, %c0_i32 : i32
    %1 = arith.extui %0 : i1 to i32
    %c0_i32_0 = arith.constant 0 : i32
    %2 = arith.cmpi ne, %1, %c0_i32_0 : i32
    scf.if %2 {
      %cst_11 = arith.constant 0.000000e+00 : f32
      %17 = vector.broadcast %cst_11 : f32 to vector<2x8xf32>
      %c0_12 = arith.constant 0 : index
      %c0_13 = arith.constant 0 : index
      %18 = vector.load %arg3[%c0_12, %c0_13] : memref<2x8xf32, #tpu.memory_space<vmem>>, vector<2x8xf32>
      tpu.vector_store %arg3[%c0_12, %c0_13], %17 {strides = array<i32>} : memref<2x8xf32, #tpu.memory_space<vmem>>, vector<2x8xf32>,
    } else {
    }
    %c0 = arith.constant 0 : index
    %c0_1 = arith.constant 0 : index
    %3 = vector.load %arg1[%c0, %c0_1] : memref<128x8xf32, #tpu.memory_space<vmem>>, vector<128x8xf32>
    %cst = arith.constant 0.000000e+00 : f32
    %4 = vector.broadcast %cst : f32 to vector<128x8xf32>
    %5 = arith.maximumf %3, %4 : vector<128x8xf32>
    %c0_2 = arith.constant 0 : index
    %c0_3 = arith.constant 0 : index
    %6 = vector.load %arg2[%c0_2, %c0_3] : memref<8x8xf32, #tpu.memory_space<vmem>>, vector<8x8xf32>
    %cst_4 = arith.constant dense<0.000000e+00> : vector<128x8xf32>
    %7 = tpu.matmul %5, %6, %cst_4 {dimension_numbers = #tpu.dot_dimension_numbers<[1], [0], [0], [1], [0, 0, 1, 1], [], []>} : vector<128x8xf32>, vector<8x8xf32>, vector<128x8xf32> -> vector<128x8xf32>
    %c0_5 = arith.constant 0 : index
    %c0_6 = arith.constant 0 : index
    %8 = vector.load %arg3[%c0_5, %c0_6] : memref<2x8xf32, #tpu.memory_space<vmem>>, vector<2x8xf32>
    %cst_7 = arith.constant dense<0.000000e+00> : vector<8xf32>
    %9 = vector.multi_reduction <add>, %7, %cst_7 [0] : vector<128x8xf32> to vector<8xf32>
    %10 = vector.shape_cast %9 : vector<8xf32> to vector<1x8xf32>
    %11 = arith.mulf %7, %7 : vector<128x8xf32>
    %cst_8 = arith.constant dense<0.000000e+00> : vector<8xf32>
    %12 = vector.multi_reduction <add>, %11, %cst_8 [0] : vector<128x8xf32> to vector<8xf32>
    %13 = vector.shape_cast %12 : vector<8xf32> to vector<1x8xf32>
    %14 = tpu.concatenate %10, %13 in 0 : vector<1x8xf32>, vector<1x8xf32> -> vector<2x8xf32>
    %15 = arith.addf %8, %14 : vector<2x8xf32>
    %c0_9 = arith.constant 0 : index
    %c0_10 = arith.constant 0 : index
    %16 = vector.load %arg3[%c0_9, %c0_10] : memref<2x8xf32, #tpu.memory_space<vmem>>, vector<2x8xf32>
    tpu.vector_store %arg3[%c0_9, %c0_10], %15 {strides = array<i32>} : memref<2x8xf32, #tpu.memory_space<vmem>>, vector<2x8xf32>,
    return
  }
  func.func @transform_0(%arg0: i32) -> (i32, i32) {
    %c0_i32 = arith.constant 0 : i32
    %c0_i32_0 = arith.constant 0 : i32
    return %arg0, %c0_i32 : i32, i32
  }
  func.func @transform_1(%arg0: i32) -> (i32, i32) {
    %c0_i32 = arith.constant 0 : i32
    %c0_i32_0 = arith.constant 0 : i32
    %c0_i32_1 = arith.constant 0 : i32
    return %c0_i32, %c0_i32_0 : i32, i32
  }
  func.func @transform_2(%arg0: i32) -> (i32, i32) {
    %c0_i32 = arith.constant 0 : i32
    %c0_i32_0 = arith.constant 0 : i32
    %c0_i32_1 = arith.constant 0 : i32
    return %c0_i32, %c0_i32_0 : i32, i32
  }
}

</mosaic_0001>

<llo_original>
// kernel: tpu_custom_call.1
$region0: #{tpu_custom_call.1}
  #allocation0 [shape = 'u32[]', space=smem, size = 0x4, offset = 0x4, fixed_abs, tag = 'smem constant byte address 0x4 - core index']
  #allocation1 [shape = 'u32[72,128]{1,0:T(1,128)}', space=vmem, size = 0x9000, scoped, tag = 'internal scratch']
  %s0 = inlined_call_operand.vmem [shape: f32[128,8], index: 0, kind: input, shape index: {}]
  %s1 = inlined_call_operand.vmem [shape: f32[8,8], index: 1, kind: input, shape index: {}]
  %s2 = inlined_call_operand.hbm [shape: f32[2,8], index: 2, kind: output, shape index: {}]
  %s3 = sld [smem:[#allocation0]]
  $region22: #{tpu_custom_call.1} parent=0
    _
  %s5 = ssub.s32 1, %s3
  %s6 = scalar_select 0, %s5, %s3
  $region1: #{tpu_custom_call.1} parent=0
    #allocation2 [shape = 'u8[1024]{0}', space=vmem, size = 0x400, scoped, tag = 'output window, operand 0, single buffered']
    #allocation3 [shape = 's32[1]{0}', space=sflag, size = 0x4, scoped, tag = 'scoped memory for tpu_custom_call.1']
    %7 = vsyncpa [#allocation3], 0
    // Predicated region
    $region2: #{tpu_custom_call.1} parent=1 // pred_check
      _
    $region3: #{tpu_custom_call.1} parent=1 // pred_check_branch
      %9 = sbr.rel (0) target = $region5
    $region4: #{tpu_custom_call.1} parent=1 // pred_region
      _
    $region5: #{tpu_custom_call.1} parent=1 // pred_fallthru
      _
    // Predicated region
    $region6: #{tpu_custom_call.1} parent=1 // pred_check
      _
    $region7: #{tpu_custom_call.1} parent=1 // pred_check_branch
      %11 = sbr.rel (0) target = $region9
    $region8: #{tpu_custom_call.1} parent=1 // pred_region
      _
    $region9: #{tpu_custom_call.1} parent=1 // pred_fallthru
      _
    %p12 = scmp.eq.s32.totalorder 0, 0
    // Predicated region
    $region10: #{tpu_custom_call.1} parent=1 // pred_check
      %p13 = pneg %p12
    $region11: #{tpu_custom_call.1} parent=1 // pred_check_branch
      %15 = sbr.rel (%p13) target = $region13
    $region12: #{tpu_custom_call.1} parent=1 // pred_region
      %vm16 = vcmask 58368
      %17 = vst.msk [vmem:[#allocation2] sm:$0x3] %vm16, 0.0
    $region13: #{tpu_custom_call.1} parent=1 // pred_fallthru
      _
    %v18 = vld [vmem:[%s0] sm:$0xff]
    %v19 = vld [vmem:[%s0 + $0x8] sm:$0xff]
    %v20 = vld [vmem:[%s0 + $0x10] sm:$0xff]
    %v21 = vld [vmem:[%s0 + $0x18] sm:$0xff]
    %v22 = vld [vmem:[%s0 + $0x20] sm:$0xff]
    %v23 = vld [vmem:[%s0 + $0x28] sm:$0xff]
    %v24 = vld [vmem:[%s0 + $0x30] sm:$0xff]
    %v25 = vld [vmem:[%s0 + $0x38] sm:$0xff]
    %v26 = vld [vmem:[%s0 + $0x40] sm:$0xff]
    %v27 = vld [vmem:[%s0 + $0x48] sm:$0xff]
    %v28 = vld [vmem:[%s0 + $0x50] sm:$0xff]
    %v29 = vld [vmem:[%s0 + $0x58] sm:$0xff]
    %v30 = vld [vmem:[%s0 + $0x60] sm:$0xff]
    %v31 = vld [vmem:[%s0 + $0x68] sm:$0xff]
    %v32 = vld [vmem:[%s0 + $0x70] sm:$0xff]
    %v33 = vld [vmem:[%s0 + $0x78] sm:$0xff]
    %v34 = vmax.f32 %v18, 0.0
    %v35 = vmax.f32 %v19, 0.0
    %v36 = vmax.f32 %v20, 0.0
    %v37 = vmax.f32 %v21, 0.0
    %v38 = vmax.f32 %v22, 0.0
    %v39 = vmax.f32 %v23, 0.0
    %v40 = vmax.f32 %v24, 0.0
    %v41 = vmax.f32 %v25, 0.0
    %v42 = vmax.f32 %v26, 0.0
    %v43 = vmax.f32 %v27, 0.0
    %v44 = vmax.f32 %v28, 0.0
    %v45 = vmax.f32 %v29, 0.0
    %v46 = vmax.f32 %v30, 0.0
    %v47 = vmax.f32 %v31, 0.0
    %v48 = vmax.f32 %v32, 0.0
    %v49 = vmax.f32 %v33, 0.0
    %v50 = vld [vmem:[%s1] sm:$0xff]
    %vm51 = vcmask 64512
    %v53 = vsel %vm51, %v34, 0
    %v56 = vsel %vm51, %v35, 0
    %v59 = vsel %vm51, %v36, 0
    %v62 = vsel %vm51, %v37, 0
    %v65 = vsel %vm51, %v38, 0
    %v68 = vsel %vm51, %v39, 0
    %v71 = vsel %vm51, %v40, 0
    %v74 = vsel %vm51, %v41, 0
    %v77 = vsel %vm51, %v42, 0
    %v80 = vsel %vm51, %v43, 0
    %v83 = vsel %vm51, %v44, 0
    %v86 = vsel %vm51, %v45, 0
    %v89 = vsel %vm51, %v46, 0
    %v92 = vsel %vm51, %v47, 0
    %v95 = vsel %vm51, %v48, 0
    %v98 = vsel %vm51, %v49, 0
    %100 = vmatpush.msra.mxu0 0.0
    %101 = vmatpush.msra.mxu0 0.0
    %102 = vmatpush.msra.mxu0 0.0
    %103 = vmatpush.msra.mxu0 0.0
    %104 = vmatpush.msra.mxu0 0.0
    %105 = vmatpush.msra.mxu0 0.0
    %106 = vmatpush.msra.mxu0 0.0
    %107 = vmatpush.msra.mxu0 0.0
    %108 = vmatpush.msra.mxu0 0.0
    %109 = vmatpush.msra.mxu0 0.0
    %110 = vmatpush.msra.mxu0 0.0
    %111 = vmatpush.msra.mxu0 0.0
    %112 = vmatpush.msra.mxu0 0.0
    %113 = vmatpush.msra.mxu0 0.0
    %114 = vmatpush.msra.mxu0 0.0
    %115 = vmatpush.msra.mxu0 %v50
    %116 = vmatmul.f32.gmra.mxu0 %v53
    %v117 = vpop.f32.mrf.mxu0
    %v118 = vadd.f32 0.0, %v117
    %119 = vmatmul.f32.gmra.mxu0 %v56
    %v120 = vpop.f32.mrf.mxu0
    %v121 = vadd.f32 0.0, %v120
    %122 = vmatmul.f32.gmra.mxu0 %v59
    %v123 = vpop.f32.mrf.mxu0
    %v124 = vadd.f32 0.0, %v123
    %125 = vmatmul.f32.gmra.mxu0 %v62
    %v126 = vpop.f32.mrf.mxu0
    %v127 = vadd.f32 0.0, %v126
    %128 = vmatmul.f32.gmra.mxu0 %v65
    %v129 = vpop.f32.mrf.mxu0
    %v130 = vadd.f32 0.0, %v129
    %131 = vmatmul.f32.gmra.mxu0 %v68
    %v132 = vpop.f32.mrf.mxu0
    %v133 = vadd.f32 0.0, %v132
    %134 = vmatmul.f32.gmra.mxu0 %v71
    %v135 = vpop.f32.mrf.mxu0
    %v136 = vadd.f32 0.0, %v135
    %137 = vmatmul.f32.gmra.mxu0 %v74
    %v138 = vpop.f32.mrf.mxu0
    %v139 = vadd.f32 0.0, %v138
    %140 = vmatmul.f32.gmra.mxu0 %v77
    %v141 = vpop.f32.mrf.mxu0
    %v142 = vadd.f32 0.0, %v141
    %143 = vmatmul.f32.gmra.mxu0 %v80
    %v144 = vpop.f32.mrf.mxu0
    %v145 = vadd.f32 0.0, %v144
    %146 = vmatmul.f32.gmra.mxu0 %v83
    %v147 = vpop.f32.mrf.mxu0
    %v148 = vadd.f32 0.0, %v147
    %149 = vmatmul.f32.gmra.mxu0 %v86
    %v150 = vpop.f32.mrf.mxu0
    %v151 = vadd.f32 0.0, %v150
    %152 = vmatmul.f32.gmra.mxu0 %v89
    %v153 = vpop.f32.mrf.mxu0
    %v154 = vadd.f32 0.0, %v153
    %155 = vmatmul.f32.gmra.mxu0 %v92
    %v156 = vpop.f32.mrf.mxu0
    %v157 = vadd.f32 0.0, %v156
    %158 = vmatmul.f32.gmra.mxu0 %v95
    %v159 = vpop.f32.mrf.mxu0
    %v160 = vadd.f32 0.0, %v159
    %161 = vmatmul.f32.gmra.mxu0 %v98
    %v162 = vpop.f32.mrf.mxu0
    %v163 = vadd.f32 0.0, %v162
    %164 = vdwg.mxu0
    %v165 = vld [vmem:[#allocation2] sm:$0x3]
    %v166 = vsel %vm51, %v118, 0.0
    %v167 = vsel %vm51, %v121, 0.0
    %v168 = vadd.f32 %v166, %v167
    %v169 = vsel %vm51, %v124, 0.0
    %v170 = vadd.f32 %v168, %v169
    %v171 = vsel %vm51, %v127, 0.0
    %v172 = vadd.f32 %v170, %v171
    %v173 = vsel %vm51, %v130, 0.0
    %v174 = vadd.f32 %v172, %v173
    %v175 = vsel %vm51, %v133, 0.0
    %v176 = vadd.f32 %v174, %v175
    %v177 = vsel %vm51, %v136, 0.0
    %v178 = vadd.f32 %v176, %v177
    %v179 = vsel %vm51, %v139, 0.0
    %v180 = vadd.f32 %v178, %v179
    %v181 = vsel %vm51, %v142, 0.0
    %v182 = vadd.f32 %v180, %v181
    %v183 = vsel %vm51, %v145, 0.0
    %v184 = vadd.f32 %v182, %v183
    %v185 = vsel %vm51, %v148, 0.0
    %v186 = vadd.f32 %v184, %v185
    %v187 = vsel %vm51, %v151, 0.0
    %v188 = vadd.f32 %v186, %v187
    %v189 = vsel %vm51, %v154, 0.0
    %v190 = vadd.f32 %v188, %v189
    %v191 = vsel %vm51, %v157, 0.0
    %v192 = vadd.f32 %v190, %v191
    %v193 = vsel %vm51, %v160, 0.0
    %v194 = vadd.f32 %v192, %v193
    %v195 = vsel %vm51, %v163, 0.0
    %v196 = vadd.f32 %v194, %v195
    %v197 = vrot.slane %v196, 4
    %v198 = vadd.f32 %v196, %v197
    %v199 = vrot.slane %v198, 2
    %v200 = vadd.f32 %v198, %v199
    %v201 = vrot.slane %v200, 1
    %v202 = vadd.f32 %v200, %v201
    %v203 = vmul.f32 %v118, %v118
    %v204 = vmul.f32 %v121, %v121
    %v205 = vmul.f32 %v124, %v124
    %v206 = vmul.f32 %v127, %v127
    %v207 = vmul.f32 %v130, %v130
    %v208 = vmul.f32 %v133, %v133
    %v209 = vmul.f32 %v136, %v136
    %v210 = vmul.f32 %v139, %v139
    %v211 = vmul.f32 %v142, %v142
    %v212 = vmul.f32 %v145, %v145
    %v213 = vmul.f32 %v148, %v148
    %v214 = vmul.f32 %v151, %v151
    %v215 = vmul.f32 %v154, %v154
    %v216 = vmul.f32 %v157, %v157
    %v217 = vmul.f32 %v160, %v160
    %v218 = vmul.f32 %v163, %v163
    %v219 = vsel %vm51, %v203, 0.0
    %v220 = vsel %vm51, %v204, 0.0
    %v221 = vadd.f32 %v219, %v220
    %v222 = vsel %vm51, %v205, 0.0
    %v223 = vadd.f32 %v221, %v222
    %v224 = vsel %vm51, %v206, 0.0
    %v225 = vadd.f32 %v223, %v224
    %v226 = vsel %vm51, %v207, 0.0
    %v227 = vadd.f32 %v225, %v226
    %v228 = vsel %vm51, %v208, 0.0
    %v229 = vadd.f32 %v227, %v228
    %v230 = vsel %vm51, %v209, 0.0
    %v231 = vadd.f32 %v229, %v230
    %v232 = vsel %vm51, %v210, 0.0
    %v233 = vadd.f32 %v231, %v232
    %v234 = vsel %vm51, %v211, 0.0
    %v235 = vadd.f32 %v233, %v234
    %v236 = vsel %vm51, %v212, 0.0
    %v237 = vadd.f32 %v235, %v236
    %v238 = vsel %vm51, %v213, 0.0
    %v239 = vadd.f32 %v237, %v238
    %v240 = vsel %vm51, %v214, 0.0
    %v241 = vadd.f32 %v239, %v240
    %v242 = vsel %vm51, %v215, 0.0
    %v243 = vadd.f32 %v241, %v242
    %v244 = vsel %vm51, %v216, 0.0
    %v245 = vadd.f32 %v243, %v244
    %v246 = vsel %vm51, %v217, 0.0
    %v247 = vadd.f32 %v245, %v246
    %v248 = vsel %vm51, %v218, 0.0
    %v249 = vadd.f32 %v247, %v248
    %v250 = vrot.slane %v249, 4
    %v251 = vadd.f32 %v249, %v250
    %v252 = vrot.slane %v251, 2
    %v253 = vadd.f32 %v251, %v252
    %v254 = vrot.slane %v253, 1
    %v255 = vadd.f32 %v253, %v254
    %vm256 = vcmask 1040384
    %v257 = vsel %vm256, %v202, %v255
    %v258 = vadd.f32 %v165, %v257
    %vm259 = vcmask 58368
    %260 = vst.msk [vmem:[#allocation2] sm:$0x3] %vm259, %v258
    // Predicated region
    $region14: #{tpu_custom_call.1} parent=1 // pred_check
      _
    $region15: #{tpu_custom_call.1} parent=1 // pred_check_branch
      %262 = sbr.rel (0) target = $region17
    $region16: #{tpu_custom_call.1} parent=1 // pred_region
      %264 = vsyncadd [#allocation3], 0
      %s266 = sshll.u32 [#allocation2], 4
      %s267 = int_to_ptr.vmem [resolvable:$true] %s266
      %s268 = sshll.u32 %s2, 4
      %s269 = int_to_ptr.hbm [resolvable:$true] %s268
      %271 = dma.vmem_to_hbm [thread:$0]  %s267, 32, %s269, [#allocation3]
    $region17: #{tpu_custom_call.1} parent=1 // pred_fallthru
      _
    // Predicated region
    $region18: #{tpu_custom_call.1} parent=1 // pred_check
      _
    $region19: #{tpu_custom_call.1} parent=1 // pred_check_branch
      %273 = sbr.rel (0) target = $region21
    $region20: #{tpu_custom_call.1} parent=1 // pred_region
      %275 = dma.done [#allocation3], 32
    $region21: #{tpu_custom_call.1} parent=1 // pred_fallthru
      _
    %276 = vsyncpa [#allocation3], 1

</llo_original>
